<compile_context>
chip_gen: v5e
topology: v5e:2x2
jax: 0.10.0
libtpu: 0.0.40
codegen_flags: <defaults>
</compile_context>

<pallas_src>
import jax
import jax.numpy as jnp
from jax.experimental import pallas as pl
from jax.experimental.pallas import tpu as pltpu


def _mix_kernel(w_ref, f1_ref, f2_ref, o_ref):
    # w_ref: (1, 1) scalar in SMEM; f1/f2/o: (TR, L) VMEM tiles.
    w = w_ref[0, 0]
    mix = 1.0 / (1.0 + jnp.exp(-w))          # sigmoid(w) -> EUP, hidden under DMA
    o_ref[...] = (f1_ref[...] * mix + f2_ref[...] * (1.0 - mix)).astype(o_ref.dtype)


def _sublane_multiple(dtype):
    itemsize = jnp.dtype(dtype).itemsize
    if itemsize >= 4:
        return 8
    if itemsize == 2:
        return 16
    return 32


def _choose_tr(rows, L, itemsize, sub):
    """Pick the row-tile size TR (multiple of `sub`, or == rows)."""
    tile_cap_bytes = 4 << 20          # ~4 MiB per stream per tile
    min_split_bytes = 2 << 20         # force >=2 grid steps when slab > ~2 MiB
    max_tr = max(sub, (tile_cap_bytes // (itemsize * L)) // sub * sub)

    slab_bytes = rows * L * itemsize
    steps = -(-rows // max_tr)
    if slab_bytes > min_split_bytes and steps < 2:
        steps = 2                     # let both v7x TensorCores take tiles
    if steps <= 1:
        return rows                   # block == full dim (always legal)
    tr = -(-rows // steps)
    tr = -(-tr // sub) * sub
    return min(tr, rows)


def _mix_pallas_2d(w_2d, f1_2d, f2_2d):
    """Run the streaming kernel on a lane-dense (rows, L) slab."""
    rows, L = f1_2d.shape
    dtype = f1_2d.dtype
    itemsize = jnp.dtype(dtype).itemsize
    sub = _sublane_multiple(dtype)

    TR = _choose_tr(rows, L, itemsize, sub)
    grid = (pl.cdiv(rows, TR),)

    # 3 streams x 2 double-buffers x tile, plus headroom for Mosaic scratch.
    live_bytes = 6 * TR * L * itemsize
    vmem_limit = int(min(48 << 20, max(live_bytes + (8 << 20), 32 << 20)))

    n_elems = rows * L
    return pl.pallas_call(
        _mix_kernel,
        out_shape=jax.ShapeDtypeStruct((rows, L), dtype),
        grid=grid,
        in_specs=[
            pl.BlockSpec(memory_space=pltpu.SMEM),        # scalar w
            pl.BlockSpec((TR, L), lambda i: (i, 0)),      # fea1 tile
            pl.BlockSpec((TR, L), lambda i: (i, 0)),      # fea2 tile
        ],
        out_specs=pl.BlockSpec((TR, L), lambda i: (i, 0)),
        compiler_params=pltpu.CompilerParams(
            dimension_semantics=("parallel",),
            vmem_limit_bytes=vmem_limit,
        ),
        cost_estimate=pl.CostEstimate(
            flops=3 * n_elems,
            transcendentals=1,
            bytes_accessed=3 * n_elems * itemsize,
        ),
    )(w_2d, f1_2d, f2_2d)


def mix_forward(fea1, fea2, w):
    """fea1, fea2: arrays of identical shape (e.g. NCHW). w: scalar parameter."""
    assert fea1.shape == fea2.shape
    orig_shape = fea1.shape
    dtype = fea1.dtype
    n = fea1.size

    w_scalar = jnp.asarray(w, jnp.float32).reshape(-1)[0]
    w_2d = w_scalar.reshape(1, 1)

    f1 = fea1.reshape(-1)
    f2 = fea2.reshape(-1)

    # Largest 128-divisible prefix goes through the kernel (zero-copy reshape,
    # no padding). Any <=127-element tail is done in plain JAX.
    n_main = (n // 128) * 128

    if n_main == 0:
        # Tiny input: plain JAX (cheaper than any kernel launch).
        mix = jax.nn.sigmoid(w_scalar).astype(jnp.float32)
        return (f1 * mix + f2 * (1.0 - mix)).astype(dtype).reshape(orig_shape)

    # Lane-dense last dim: largest multiple of 128 (capped at 1024) dividing n_main.
    L = 128
    for cand in (1024, 512, 256):
        if n_main % cand == 0:
            L = cand
            break
    rows = n_main // L

    f1_main = f1[:n_main].reshape(rows, L)
    f2_main = f2[:n_main].reshape(rows, L)
    out_main = _mix_pallas_2d(w_2d, f1_main, f2_main).reshape(-1)

    if n_main == n:
        return out_main.reshape(orig_shape)

    # <=127-element tail: plain JAX (negligible vs. the kernel's HBM traffic).
    mix = jax.nn.sigmoid(w_scalar).astype(jnp.float32)
    tail = (f1[n_main:] * mix + f2[n_main:] * (1.0 - mix)).astype(dtype)
    return jnp.concatenate([out_main, tail]).reshape(orig_shape)


if __name__ == "__main__":
    # Deterministic parameter init matching the module's __init__: w = [-0.8]
    w_param = jnp.array([-0.8], dtype=jnp.float32)

    key = jax.random.PRNGKey(0)
    k1, k2, k3, k4 = jax.random.split(key, 4)

    # Main test: shape consistent with an NCHW feature map (divisible by 128).
    fea1 = jax.random.normal(k1, (2, 4, 16, 16), dtype=jnp.float32)
    fea2 = jax.random.normal(k2, (2, 4, 16, 16), dtype=jnp.float32)

    out = mix_forward(fea1, fea2, w_param)
    jax.block_until_ready(out)

    mix_factor = jax.nn.sigmoid(w_param)[0]
    ref = fea1 * mix_factor + fea2 * (1.0 - mix_factor)
    assert out.shape == fea1.shape
    assert jnp.allclose(out, ref, atol=1e-6, rtol=1e-6)

    # Secondary test: size NOT divisible by 128 exercises the prefix+tail path.
    g1 = jax.random.normal(k3, (2, 3, 5, 7), dtype=jnp.float32)
    g2 = jax.random.normal(k4, (2, 3, 5, 7), dtype=jnp.float32)
    out2 = mix_forward(g1, g2, w_param)
    jax.block_until_ready(out2)
    ref2 = g1 * mix_factor + g2 * (1.0 - mix_factor)
    assert out2.shape == g1.shape
    assert jnp.allclose(out2, ref2, atol=1e-6, rtol=1e-6)

    print("KERNEL_OK")
</pallas_src>

<mosaic_0001>
module attributes {stable_mosaic.version = 11 : i64} {
  func.func @_mix_kernel(%arg0: i32, %arg1: memref<1x1xf32, #tpu.memory_space<smem>>, %arg2: memref<2x1024xf32, #tpu.memory_space<vmem>>, %arg3: memref<2x1024xf32, #tpu.memory_space<vmem>>, %arg4: memref<2x1024xf32, #tpu.memory_space<vmem>>) attributes {dimension_semantics = [#tpu.dimension_semantics<parallel>], iteration_bounds = array<i64: 1>, scalar_prefetch = 0 : i64, scratch_operands = 0 : i64, tpu.core_type = #tpu.core_type<tc>, window_params = [{transform_indices = @transform_0, window_bounds = array<i64: 1, 1>}, {transform_indices = @transform_1, window_bounds = array<i64: 2, 1024>}, {transform_indices = @transform_2, window_bounds = array<i64: 2, 1024>}, {transform_indices = @transform_3, window_bounds = array<i64: 2, 1024>}]} {
    %c0 = arith.constant 0 : index
    %c0_0 = arith.constant 0 : index
    %0 = memref.load %arg1[%c0, %c0_0] : memref<1x1xf32, #tpu.memory_space<smem>>
    %cst = arith.constant 0.000000e+00 : f32
    %1 = arith.subf %cst, %0 : f32
    %2 = math.exp %1 : f32
    %cst_1 = arith.constant 1.000000e+00 : f32
    %3 = arith.addf %cst_1, %2 : f32
    %cst_2 = arith.constant 1.000000e+00 : f32
    %4 = arith.divf %cst_2, %3 : f32
    %c0_3 = arith.constant 0 : index
    %c0_4 = arith.constant 0 : index
    %5 = vector.load %arg2[%c0_3, %c0_4] : memref<2x1024xf32, #tpu.memory_space<vmem>>, vector<2x1024xf32>
    %6 = vector.broadcast %4 : f32 to vector<2x1024xf32>
    %7 = arith.mulf %5, %6 : vector<2x1024xf32>
    %c0_5 = arith.constant 0 : index
    %c0_6 = arith.constant 0 : index
    %8 = vector.load %arg3[%c0_5, %c0_6] : memref<2x1024xf32, #tpu.memory_space<vmem>>, vector<2x1024xf32>
    %cst_7 = arith.constant 1.000000e+00 : f32
    %9 = arith.subf %cst_7, %4 : f32
    %10 = vector.broadcast %9 : f32 to vector<2x1024xf32>
    %11 = arith.mulf %8, %10 : vector<2x1024xf32>
    %12 = arith.addf %7, %11 : vector<2x1024xf32>
    %c0_8 = arith.constant 0 : index
    %c0_9 = arith.constant 0 : index
    %13 = vector.load %arg4[%c0_8, %c0_9] : memref<2x1024xf32, #tpu.memory_space<vmem>>, vector<2x1024xf32>
    tpu.vector_store %arg4[%c0_8, %c0_9], %12 {strides = array<i32>} : memref<2x1024xf32, #tpu.memory_space<vmem>>, vector<2x1024xf32>,
    return
  }
  func.func @transform_0(%arg0: i32) -> (i32, i32) {
    %c0_i32 = arith.constant 0 : i32
    %c0_i32_0 = arith.constant 0 : i32
    %c0_i32_1 = arith.constant 0 : i32
    return %c0_i32, %c0_i32_0 : i32, i32
  }
  func.func @transform_1(%arg0: i32) -> (i32, i32) {
    %c0_i32 = arith.constant 0 : i32
    %c0_i32_0 = arith.constant 0 : i32
    return %arg0, %c0_i32 : i32, i32
  }
  func.func @transform_2(%arg0: i32) -> (i32, i32) {
    %c0_i32 = arith.constant 0 : i32
    %c0_i32_0 = arith.constant 0 : i32
    return %arg0, %c0_i32 : i32, i32
  }
  func.func @transform_3(%arg0: i32) -> (i32, i32) {
    %c0_i32 = arith.constant 0 : i32
    %c0_i32_0 = arith.constant 0 : i32
    return %arg0, %c0_i32 : i32, i32
  }
}

</mosaic_0001>

<llo_original>
// kernel: tpu_custom_call.1
$region0: #{tpu_custom_call.1}
  #allocation0 [shape = 'u32[]', space=smem, size = 0x4, offset = 0x4, fixed_abs, tag = 'smem constant byte address 0x4 - core index']
  #allocation1 [shape = 'u32[72,128]{1,0:T(1,128)}', space=vmem, size = 0x9000, scoped, tag = 'internal scratch']
  #allocation2 [shape = 'f32[1,1]{1,0:T(1,128)S(6)}', space=smem, size = 0x200, scoped, tag = 'scoped memory for tpu_custom_call.1']
  %s0 = inlined_call_operand.<no memory space> [shape: f32[1,1], index: 0, kind: input, shape index: {}]
  %s1 = inlined_call_operand.hbm [shape: f32[2,1024], index: 1, kind: input, shape index: {}]
  %s2 = inlined_call_operand.hbm [shape: f32[2,1024], index: 2, kind: input, shape index: {}]
  %s3 = inlined_call_operand.hbm [shape: f32[2,1024], index: 3, kind: output, shape index: {}]
  %s4 = sld [smem:[#allocation0]]
  $region30: #{tpu_custom_call.1} parent=0
    _
  %s6 = ssub.s32 1, %s4
  %s7 = scalar_select 0, %s6, %s4
  %8 = sst [smem:[#allocation2]] %s0
  $region1: #{tpu_custom_call.1} parent=0
    #allocation3 [shape = 'u8[8192]{0}', space=vmem, size = 0x2000, scoped, tag = 'input window, operand 1, single buffered']
    #allocation4 [shape = 's32[1]{0}', space=sflag, size = 0x4, scoped, tag = 'scoped memory for tpu_custom_call.1']
    #allocation5 [shape = 's32[1]{0}', space=sflag, size = 0x4, scoped, tag = 'scoped memory for tpu_custom_call.1']
    #allocation6 [shape = 'u8[8192]{0}', space=vmem, size = 0x2000, scoped, tag = 'input window, operand 2, single buffered']
    #allocation7 [shape = 's32[1]{0}', space=sflag, size = 0x4, scoped, tag = 'scoped memory for tpu_custom_call.1']
    #allocation8 [shape = 'u8[8192]{0}', space=vmem, size = 0x2000, scoped, tag = 'output window, operand 0, single buffered']
    %9 = vsyncpa [#allocation4], 0
    %10 = vsyncpa [#allocation7], 0
    %11 = vsyncpa [#allocation5], 0
    // Predicated region
    $region2: #{tpu_custom_call.1} parent=1 // pred_check
      _
    $region3: #{tpu_custom_call.1} parent=1 // pred_check_branch
      %13 = sbr.rel (0) target = $region5
    $region4: #{tpu_custom_call.1} parent=1 // pred_region
      _
    $region5: #{tpu_custom_call.1} parent=1 // pred_fallthru
      _
    // Predicated region
    $region6: #{tpu_custom_call.1} parent=1 // pred_check
      _
    $region7: #{tpu_custom_call.1} parent=1 // pred_check_branch
      %15 = sbr.rel (0) target = $region9
    $region8: #{tpu_custom_call.1} parent=1 // pred_region
      %17 = vsyncadd [#allocation4], 0
      %s19 = sshll.u32 %s1, 4
      %s20 = int_to_ptr.hbm [resolvable:$true] %s19
      %s21 = sshll.u32 [#allocation3], 4
      %s22 = int_to_ptr.vmem [resolvable:$true] %s21
      %24 = dma.hbm_to_vmem [thread:$0]  %s20, 256, %s22, [#allocation4]
    $region9: #{tpu_custom_call.1} parent=1 // pred_fallthru
      _
    // Predicated region
    $region10: #{tpu_custom_call.1} parent=1 // pred_check
      _
    $region11: #{tpu_custom_call.1} parent=1 // pred_check_branch
      %26 = sbr.rel (0) target = $region13
    $region12: #{tpu_custom_call.1} parent=1 // pred_region
      %28 = vsyncadd [#allocation7], 0
      %s30 = sshll.u32 %s2, 4
      %s31 = int_to_ptr.hbm [resolvable:$true] %s30
      %s32 = sshll.u32 [#allocation6], 4
      %s33 = int_to_ptr.vmem [resolvable:$true] %s32
      %35 = dma.hbm_to_vmem [thread:$0]  %s31, 256, %s33, [#allocation7]
    $region13: #{tpu_custom_call.1} parent=1 // pred_fallthru
      _
    // Predicated region
    $region14: #{tpu_custom_call.1} parent=1 // pred_check
      _
    $region15: #{tpu_custom_call.1} parent=1 // pred_check_branch
      %37 = sbr.rel (0) target = $region17
    $region16: #{tpu_custom_call.1} parent=1 // pred_region
      %39 = dma.done [#allocation4], 256
    $region17: #{tpu_custom_call.1} parent=1 // pred_fallthru
      _
    // Predicated region
    $region18: #{tpu_custom_call.1} parent=1 // pred_check
      _
    $region19: #{tpu_custom_call.1} parent=1 // pred_check_branch
      %41 = sbr.rel (0) target = $region21
    $region20: #{tpu_custom_call.1} parent=1 // pred_region
      %43 = dma.done [#allocation7], 256
    $region21: #{tpu_custom_call.1} parent=1 // pred_fallthru
      _
    %s44 = sld [smem:[#allocation2]]
    %s45 = ssub.f32 0.0, %s44
    %v46 = vstv %s45
    %v47 = vmul.f32 %v46, 1.442695
    %v48 = vpow.pop %v47
    %s49 = vtos %v48
    %s50 = sadd.f32 %s49, 1.0
    %v51 = vstv %s50
    %v52 = vrcp.pop %v51
    %v53 = vmul.f32 %v51, %v52
    %v54 = vsub.f32 1.0, %v53
    %v55 = vmul.f32 %v52, %v54
    %v56 = vadd.f32 %v52, %v55
    %vm57 = vweird.f32 %v51
    %vm58 = vweird.f32 %v52
    %vm59 = vmor %vm57, %vm58
    %v60 = vsel %vm59, %v52, %v56
    %v61 = vand.u32 2147483647, %v51
    %vm62 = vcmp.eq.f32.partialorder %v61, 8.507059e+37
    %v63 = vand.u32 %v51, 2147483648
    %v64 = vor.u32 1.1754944e-38, %v63
    %v65 = vsel %vm62, %v64, %v60
    %s66 = vtos %v65
    %v67 = vld [vmem:[#allocation3] sm:$0xff]
    %v68 = vld [vmem:[#allocation3 + $0x8] sm:$0xff]
    %v69 = vstv %s66
    %v70 = vmul.f32 %v67, %v69
    %v71 = vmul.f32 %v68, %v69
    %v72 = vld [vmem:[#allocation6] sm:$0xff]
    %v73 = vld [vmem:[#allocation6 + $0x8] sm:$0xff]
    %s74 = ssub.f32 1.0, %s66
    %v75 = vstv %s74
    %v76 = vmul.f32 %v72, %v75
    %v77 = vmul.f32 %v73, %v75
    %v78 = vadd.f32 %v70, %v76
    %v79 = vadd.f32 %v71, %v77
    %80 = vst [vmem:[#allocation8] sm:$0xff] %v78
    %81 = vst [vmem:[#allocation8 + $0x8] sm:$0xff] %v79
    // Predicated region
    $region22: #{tpu_custom_call.1} parent=1 // pred_check
      _
    $region23: #{tpu_custom_call.1} parent=1 // pred_check_branch
      %83 = sbr.rel (0) target = $region25
    $region24: #{tpu_custom_call.1} parent=1 // pred_region
      %85 = vsyncadd [#allocation5], 0
      %s87 = sshll.u32 [#allocation8], 4
      %s88 = int_to_ptr.vmem [resolvable:$true] %s87
      %s89 = sshll.u32 %s3, 4
      %s90 = int_to_ptr.hbm [resolvable:$true] %s89
      %92 = dma.vmem_to_hbm [thread:$0]  %s88, 256, %s90, [#allocation5]
    $region25: #{tpu_custom_call.1} parent=1 // pred_fallthru
      _
    // Predicated region
    $region26: #{tpu_custom_call.1} parent=1 // pred_check
      _
    $region27: #{tpu_custom_call.1} parent=1 // pred_check_branch
      %94 = sbr.rel (0) target = $region29
    $region28: #{tpu_custom_call.1} parent=1 // pred_region
      %96 = dma.done [#allocation5], 256
    $region29: #{tpu_custom_call.1} parent=1 // pred_fallthru
      _
    %97 = vsyncpa [#allocation4], 1
    %98 = vsyncpa [#allocation7], 1
    %99 = vsyncpa [#allocation5], 1

</llo_original>
